<compile_context>
chip_gen: v7x
topology: tpu7x:2x2x1
jax: 0.10.0
libtpu: 0.0.40
codegen_flags: <defaults>
</compile_context>

<pallas_src>
import math

import jax
import jax.numpy as jnp
from jax import lax
from jax.experimental import pallas as pl
from jax.experimental.pallas import tpu as pltpu


def _fr_kernel_f32(x_ref, w_ref, wdiag_ref, b_ref, o_ref):
    """One (i, j, k) grid step; accumulate directly into the resident f32 output tile.

    x_ref:     (tm, tk)  x tile along the contraction (k) axis
    w_ref:     (tn, tk)  W tile (out_features x in_features layout)
    wdiag_ref: (1,  tn)  diag(W) slice for output block j (f32)
    b_ref:     (1,  tn)  bias slice for output block j (f32)
    o_ref:     (tm, tn)  f32 output tile (resident across the k axis)
    """
    j = pl.program_id(1)
    k = pl.program_id(2)

    @pl.when(k == 0)
    def _init():
        o_ref[...] = jnp.zeros_like(o_ref)

    # x @ W^T without materializing the transpose: contract dim 1 of both.
    o_ref[...] += lax.dot_general(
        x_ref[...], w_ref[...],
        dimension_numbers=(((1,), (1,)), ((), ())),
        preferred_element_type=jnp.float32)

    # Diagonal correction fused into the k loop: with tn == tk the k == j
    # x tile's columns align with output block j, so no second x stream.
    @pl.when(k == j)
    def _diag():
        o_ref[...] -= x_ref[...] * wdiag_ref[...]

    @pl.when(k == pl.num_programs(2) - 1)
    def _bias():
        o_ref[...] += b_ref[...]


def _fr_kernel_acc(x_ref, w_ref, wdiag_ref, b_ref, o_ref, acc_ref):
    """Same computation, but with an f32 scratch accumulator (narrow output dtypes)."""
    j = pl.program_id(1)
    k = pl.program_id(2)

    @pl.when(k == 0)
    def _init():
        acc_ref[...] = jnp.zeros_like(acc_ref)

    acc_ref[...] += lax.dot_general(
        x_ref[...], w_ref[...],
        dimension_numbers=(((1,), (1,)), ((), ())),
        preferred_element_type=jnp.float32)

    @pl.when(k == j)
    def _diag():
        acc_ref[...] -= x_ref[...].astype(jnp.float32) * wdiag_ref[...]

    @pl.when(k == pl.num_programs(2) - 1)
    def _finalize():
        o_ref[...] = (acc_ref[...] + b_ref[...]).astype(o_ref.dtype)


def _round_up(v, m):
    return ((v + m - 1) // m) * m


def _pick_tile(dim, target, align):
    """Largest `align`-multiple divisor of `dim` (a multiple of `align`) <= target."""
    if dim <= target:
        return dim
    t = (target // align) * align
    while t >= align:
        if dim % t == 0:
            return t
        t -= align
    return align


def feature_regression(x, W, b, *, tm_target=512, tn_target=512):
    """z_h = x @ (W * (1 - eye)).T + b in a single Pallas kernel."""
    B, D = x.shape
    assert W.shape == (D, D)
    assert b.shape == (D,)
    out_dtype = x.dtype

    # ---- tile selection (tn == tk enforced for the fused diag correction) ----
    # Lane/contraction tile: 128-aligned, capped at tn_target; pad D up to a
    # multiple of it (no full-dimension fallback -> no VMEM cliff for large D).
    tn = min((tn_target // 128) * 128, _round_up(D, 128))
    D_pad = _round_up(D, tn)
    tk = tn

    # Batch tile: sublane-aligned for the input dtype packing (8 for 4-byte,
    # 16 for 2-byte, 32 for 1-byte elements).
    align_m = 8 * max(1, 4 // jnp.dtype(x.dtype).itemsize)
    B_pad = _round_up(B, align_m)
    tm = _pick_tile(B_pad, tm_target, align_m)
    B_pad = _round_up(B_pad, tm)

    # ---- cheap wrapper-side prep: pad + extract diag(W) ----
    if B_pad != B or D_pad != D:
        x = jnp.pad(x, ((0, B_pad - B), (0, D_pad - D)))
    if D_pad != D:
        W = jnp.pad(W, ((0, D_pad - D), (0, D_pad - D)))
        b = jnp.pad(b, (0, D_pad - D))
    wdiag = jnp.diagonal(W).reshape(1, D_pad).astype(jnp.float32)
    b2d = b.reshape(1, D_pad).astype(jnp.float32)

    grid = (B_pad // tm, D_pad // tn, D_pad // tk)

    in_specs = [
        pl.BlockSpec((tm, tk), lambda i, j, k: (i, k)),   # x
        pl.BlockSpec((tn, tk), lambda i, j, k: (j, k)),   # W
        pl.BlockSpec((1, tn), lambda i, j, k: (0, j)),    # diag(W)
        pl.BlockSpec((1, tn), lambda i, j, k: (0, j)),    # bias
    ]
    out_spec = pl.BlockSpec((tm, tn), lambda i, j, k: (i, j))
    compiler_params = pltpu.CompilerParams(
        dimension_semantics=("parallel", "parallel", "arbitrary"),
        vmem_limit_bytes=32 * 1024 * 1024,
    )

    if out_dtype == jnp.float32:
        # Accumulate directly into the resident f32 output tile (no scratch).
        out = pl.pallas_call(
            _fr_kernel_f32,
            out_shape=jax.ShapeDtypeStruct((B_pad, D_pad), jnp.float32),
            grid_spec=pltpu.PrefetchScalarGridSpec(
                num_scalar_prefetch=0, grid=grid,
                in_specs=in_specs, out_specs=out_spec),
            compiler_params=compiler_params,
        )(x, W, wdiag, b2d)
    else:
        out = pl.pallas_call(
            _fr_kernel_acc,
            out_shape=jax.ShapeDtypeStruct((B_pad, D_pad), out_dtype),
            grid_spec=pltpu.PrefetchScalarGridSpec(
                num_scalar_prefetch=0, grid=grid,
                in_specs=in_specs, out_specs=out_spec,
                scratch_shapes=[pltpu.VMEM((tm, tn), jnp.float32)]),
            compiler_params=compiler_params,
        )(x, W, wdiag, b2d)

    if B_pad != B or D_pad != D:
        out = out[:B, :D]
    return out


def _reference(x, W, b):
    D = W.shape[0]
    m = jnp.ones((D, D), jnp.float32) - jnp.eye(D, dtype=jnp.float32)
    xf = x.astype(jnp.float32)
    Wf = W.astype(jnp.float32)
    return (jnp.dot(xf, (Wf * m).T, precision=lax.Precision.HIGHEST)
            + b.astype(jnp.float32))


def _make_inputs(key, batch, input_size, dtype=jnp.float32):
    kx, kw, kb = jax.random.split(key, 3)
    # Mirrors reset_parameters(): uniform(-stdv, stdv), stdv = 1/sqrt(input_size).
    stdv = 1.0 / math.sqrt(input_size)
    W = jax.random.uniform(kw, (input_size, input_size), jnp.float32,
                           minval=-stdv, maxval=stdv).astype(dtype)
    b = jax.random.uniform(kb, (input_size,), jnp.float32,
                           minval=-stdv, maxval=stdv).astype(dtype)
    x = jax.random.normal(kx, (batch, input_size), jnp.float32).astype(dtype)
    return x, W, b


if __name__ == "__main__":
    key = jax.random.PRNGKey(0)
    k_small, k_pad, k_big, k_bf16 = jax.random.split(key, 4)

    # Small case (typical module use): single grid point after padding D to 128.
    x, W, b = _make_inputs(k_small, 8, 32)
    out = jax.block_until_ready(feature_regression(x, W, b))
    ref = _reference(x, W, b)
    assert out.shape == (8, 32)
    assert jnp.allclose(out, ref, atol=1e-5, rtol=1e-5), "small-case mismatch"

    # Non-aligned shapes: exercises batch + feature zero-padding and slicing.
    x, W, b = _make_inputs(k_pad, 5, 200)
    out = jax.block_until_ready(feature_regression(x, W, b))
    ref = _reference(x, W, b)
    assert out.shape == (5, 200)
    assert jnp.allclose(out, ref, atol=1e-4, rtol=1e-4), "padded-case mismatch"

    # Tiled case: grid (1, 2, 2) -> exercises k-loop accumulation and the
    # fused k == j diagonal correction across blocks.
    x, W, b = _make_inputs(k_big, 16, 1024)
    out = jax.block_until_ready(feature_regression(x, W, b))
    ref = _reference(x, W, b)
    assert out.shape == (16, 1024)
    assert jnp.allclose(out, ref, atol=5e-4, rtol=5e-4), "tiled-case mismatch"

    # bf16 inputs: exercises the scratch-accumulator path.
    xb, Wb, bb = _make_inputs(k_bf16, 8, 256, dtype=jnp.bfloat16)
    outb = jax.block_until_ready(feature_regression(xb, Wb, bb))
    refb = _reference(xb, Wb, bb)
    assert outb.shape == (8, 256)
    assert jnp.allclose(outb.astype(jnp.float32), refb, atol=3e-2, rtol=3e-2), \
        "bf16-case mismatch"

    print("KERNEL_OK")
</pallas_src>

<mosaic_0001>
module attributes {stable_mosaic.version = 11 : i64} {
  func.func @_fr_kernel_f32(%arg0: i32, %arg1: i32, %arg2: i32, %arg3: memref<8x128xf32, #tpu.memory_space<vmem>>, %arg4: memref<128x128xf32, #tpu.memory_space<vmem>>, %arg5: memref<1x128xf32, #tpu.memory_space<vmem>>, %arg6: memref<1x128xf32, #tpu.memory_space<vmem>>, %arg7: memref<8x128xf32, #tpu.memory_space<vmem>>) attributes {dimension_semantics = [#tpu.dimension_semantics<parallel>, #tpu.dimension_semantics<parallel>, #tpu.dimension_semantics<arbitrary>], iteration_bounds = array<i64: 1, 1, 1>, scalar_prefetch = 0 : i64, scratch_operands = 0 : i64, tpu.core_type = #tpu.core_type<tc>, window_params = [{transform_indices = @transform_0, window_bounds = array<i64: 8, 128>}, {transform_indices = @transform_1, window_bounds = array<i64: 128, 128>}, {transform_indices = @transform_2, window_bounds = array<i64: 1, 128>}, {transform_indices = @transform_3, window_bounds = array<i64: 1, 128>}, {transform_indices = @transform_4, window_bounds = array<i64: 8, 128>}]} {
    %c0_i32 = arith.constant 0 : i32
    %0 = arith.cmpi eq, %arg2, %c0_i32 : i32
    %1 = arith.extui %0 : i1 to i32
    %c0_i32_0 = arith.constant 0 : i32
    %2 = arith.cmpi ne, %1, %c0_i32_0 : i32
    scf.if %2 {
      %cst_11 = arith.constant 0.000000e+00 : f32
      %15 = vector.broadcast %cst_11 : f32 to vector<8x128xf32>
      %c0_12 = arith.constant 0 : index
      %c0_13 = arith.constant 0 : index
      %16 = vector.load %arg7[%c0_12, %c0_13] : memref<8x128xf32, #tpu.memory_space<vmem>>, vector<8x128xf32>
      tpu.vector_store %arg7[%c0_12, %c0_13], %15 {strides = array<i32>} : memref<8x128xf32, #tpu.memory_space<vmem>>, vector<8x128xf32>,
    } else {
    }
    %c0 = arith.constant 0 : index
    %c0_1 = arith.constant 0 : index
    %3 = vector.load %arg7[%c0, %c0_1] : memref<8x128xf32, #tpu.memory_space<vmem>>, vector<8x128xf32>
    %c0_2 = arith.constant 0 : index
    %c0_3 = arith.constant 0 : index
    %4 = vector.load %arg3[%c0_2, %c0_3] : memref<8x128xf32, #tpu.memory_space<vmem>>, vector<8x128xf32>
    %c0_4 = arith.constant 0 : index
    %c0_5 = arith.constant 0 : index
    %5 = vector.load %arg4[%c0_4, %c0_5] : memref<128x128xf32, #tpu.memory_space<vmem>>, vector<128x128xf32>
    %cst = arith.constant dense<0.000000e+00> : vector<8x128xf32>
    %6 = tpu.matmul %4, %5, %cst {dimension_numbers = #tpu.dot_dimension_numbers<[1], [1], [0], [0], [0, 0, 1, 0], [], []>} : vector<8x128xf32>, vector<128x128xf32>, vector<8x128xf32> -> vector<8x128xf32>
    %7 = arith.addf %3, %6 : vector<8x128xf32>
    %c0_6 = arith.constant 0 : index
    %c0_7 = arith.constant 0 : index
    %8 = vector.load %arg7[%c0_6, %c0_7] : memref<8x128xf32, #tpu.memory_space<vmem>>, vector<8x128xf32>
    tpu.vector_store %arg7[%c0_6, %c0_7], %7 {strides = array<i32>} : memref<8x128xf32, #tpu.memory_space<vmem>>, vector<8x128xf32>,
    %9 = arith.cmpi eq, %arg2, %arg1 : i32
    %10 = arith.extui %9 : i1 to i32
    %c0_i32_8 = arith.constant 0 : i32
    %11 = arith.cmpi ne, %10, %c0_i32_8 : i32
    scf.if %11 {
      %c0_11 = arith.constant 0 : index
      %c0_12 = arith.constant 0 : index
      %15 = vector.load %arg7[%c0_11, %c0_12] : memref<8x128xf32, #tpu.memory_space<vmem>>, vector<8x128xf32>
      %c0_13 = arith.constant 0 : index
      %c0_14 = arith.constant 0 : index
      %16 = vector.load %arg3[%c0_13, %c0_14] : memref<8x128xf32, #tpu.memory_space<vmem>>, vector<8x128xf32>
      %c0_15 = arith.constant 0 : index
      %c0_16 = arith.constant 0 : index
      %17 = vector.load %arg5[%c0_15, %c0_16] : memref<1x128xf32, #tpu.memory_space<vmem>>, vector<1x128xf32>
      %18 = vector.broadcast %17 : vector<1x128xf32> to vector<8x128xf32>
      %19 = arith.mulf %16, %18 : vector<8x128xf32>
      %20 = arith.subf %15, %19 : vector<8x128xf32>
      %c0_17 = arith.constant 0 : index
      %c0_18 = arith.constant 0 : index
      %21 = vector.load %arg7[%c0_17, %c0_18] : memref<8x128xf32, #tpu.memory_space<vmem>>, vector<8x128xf32>
      tpu.vector_store %arg7[%c0_17, %c0_18], %20 {strides = array<i32>} : memref<8x128xf32, #tpu.memory_space<vmem>>, vector<8x128xf32>,
    } else {
    }
    %c0_i32_9 = arith.constant 0 : i32
    %12 = arith.cmpi eq, %arg2, %c0_i32_9 : i32
    %13 = arith.extui %12 : i1 to i32
    %c0_i32_10 = arith.constant 0 : i32
    %14 = arith.cmpi ne, %13, %c0_i32_10 : i32
    scf.if %14 {
      %c0_11 = arith.constant 0 : index
      %c0_12 = arith.constant 0 : index
      %15 = vector.load %arg7[%c0_11, %c0_12] : memref<8x128xf32, #tpu.memory_space<vmem>>, vector<8x128xf32>
      %c0_13 = arith.constant 0 : index
      %c0_14 = arith.constant 0 : index
      %16 = vector.load %arg6[%c0_13, %c0_14] : memref<1x128xf32, #tpu.memory_space<vmem>>, vector<1x128xf32>
      %17 = vector.broadcast %16 : vector<1x128xf32> to vector<8x128xf32>
      %18 = arith.addf %15, %17 : vector<8x128xf32>
      %c0_15 = arith.constant 0 : index
      %c0_16 = arith.constant 0 : index
      %19 = vector.load %arg7[%c0_15, %c0_16] : memref<8x128xf32, #tpu.memory_space<vmem>>, vector<8x128xf32>
      tpu.vector_store %arg7[%c0_15, %c0_16], %18 {strides = array<i32>} : memref<8x128xf32, #tpu.memory_space<vmem>>, vector<8x128xf32>,
    } else {
    }
    return
  }
  func.func @transform_0(%arg0: i32, %arg1: i32, %arg2: i32) -> (i32, i32) {
    %c0_i32 = arith.constant 0 : i32
    return %arg0, %arg2 : i32, i32
  }
  func.func @transform_1(%arg0: i32, %arg1: i32, %arg2: i32) -> (i32, i32) {
    %c0_i32 = arith.constant 0 : i32
    return %arg1, %arg2 : i32, i32
  }
  func.func @transform_2(%arg0: i32, %arg1: i32, %arg2: i32) -> (i32, i32) {
    %c0_i32 = arith.constant 0 : i32
    %c0_i32_0 = arith.constant 0 : i32
    return %c0_i32, %arg1 : i32, i32
  }
  func.func @transform_3(%arg0: i32, %arg1: i32, %arg2: i32) -> (i32, i32) {
    %c0_i32 = arith.constant 0 : i32
    %c0_i32_0 = arith.constant 0 : i32
    return %c0_i32, %arg1 : i32, i32
  }
  func.func @transform_4(%arg0: i32, %arg1: i32, %arg2: i32) -> (i32, i32) {
    %c0_i32 = arith.constant 0 : i32
    return %arg0, %arg1 : i32, i32
  }
}

</mosaic_0001>

<llo_original>
// kernel: tpu_custom_call.1
$region0: #{tpu_custom_call.1}
  #allocation0 [shape = 'u32[]', space=smem, size = 0x4, offset = 0x4, fixed_abs, tag = 'smem constant byte address 0x4 - core index']
  #allocation1 [shape = 'u32[144,128]{1,0:T(1,128)}', space=vmem, size = 0x12000, scoped, tag = 'internal scratch']
  %s0 = inlined_call_operand.hbm [shape: f32[8,128], index: 0, kind: input, shape index: {}]
  %s1 = inlined_call_operand.hbm [shape: f32[128,128], index: 1, kind: input, shape index: {}]
  %s2 = inlined_call_operand.vmem [shape: f32[1,128], index: 2, kind: input, shape index: {}]
  %s3 = inlined_call_operand.vmem [shape: f32[1,128], index: 3, kind: input, shape index: {}]
  %s4 = inlined_call_operand.hbm [shape: f32[8,128], index: 4, kind: output, shape index: {}]
  %s5 = sld [smem:[#allocation0]]
  $region46: #{tpu_custom_call.1} parent=0
    _
  %s7 = ssub.s32 1, %s5
  %s8 = scalar_select 0, %s7, %s5
  $region1: #{tpu_custom_call.1} parent=0
    #allocation2 [shape = 'u8[4096]{0}', space=vmem, size = 0x1000, scoped, tag = 'input window, operand 0, single buffered']
    #allocation3 [shape = 's32[1]{0}', space=sflag, size = 0x4, scoped, tag = 'scoped memory for tpu_custom_call.1']
    #allocation4 [shape = 's32[1]{0}', space=sflag, size = 0x4, scoped, tag = 'scoped memory for tpu_custom_call.1']
    #allocation5 [shape = 'u8[65536]{0}', space=vmem, size = 0x10000, scoped, tag = 'input window, operand 1, single buffered']
    #allocation6 [shape = 's32[1]{0}', space=sflag, size = 0x4, scoped, tag = 'scoped memory for tpu_custom_call.1']
    #allocation7 [shape = 'u8[4096]{0}', space=vmem, size = 0x1000, scoped, tag = 'output window, operand 0, single buffered']
    %9 = vsyncpa [#allocation3], 0
    %10 = vsyncpa [#allocation6], 0
    %11 = vsyncpa [#allocation4], 0
    // Predicated region
    $region2: #{tpu_custom_call.1} parent=1 // pred_check
      _
    $region3: #{tpu_custom_call.1} parent=1 // pred_check_branch
      %13 = sbr.rel (0) target = $region5
    $region4: #{tpu_custom_call.1} parent=1 // pred_region
      %s15 = ssub.s32 128, 128
      %16 = vsyncadd [#allocation3], %s15
      %s18 = sshll.u32 [#allocation2], 4
      %s19 = int_to_ptr.vmem [resolvable:$true] %s18
      %21 = dma.hbm_to_vmem [thread:$0]  %s0, 128, %s19, [#allocation3]
    $region5: #{tpu_custom_call.1} parent=1 // pred_fallthru
      _
    // Predicated region
    $region6: #{tpu_custom_call.1} parent=1 // pred_check
      _
    $region7: #{tpu_custom_call.1} parent=1 // pred_check_branch
      %23 = sbr.rel (0) target = $region9
    $region8: #{tpu_custom_call.1} parent=1 // pred_region
      %s25 = ssub.s32 2048, 2048
      %26 = vsyncadd [#allocation6], %s25
      %s27 = sshll.u32 [#allocation5], 4
      %s28 = int_to_ptr.vmem [resolvable:$true] %s27
      %33 = dma.hbm_to_vmem [thread:$0]  %s1, 2048, %s28, [#allocation6], 128, 128, 8
    $region9: #{tpu_custom_call.1} parent=1 // pred_fallthru
      _
    // Predicated region
    $region10: #{tpu_custom_call.1} parent=1 // pred_check
      _
    $region11: #{tpu_custom_call.1} parent=1 // pred_check_branch
      %35 = sbr.rel (0) target = $region13
    $region12: #{tpu_custom_call.1} parent=1 // pred_region
      _
    $region13: #{tpu_custom_call.1} parent=1 // pred_fallthru
      _
    // Predicated region
    $region14: #{tpu_custom_call.1} parent=1 // pred_check
      _
    $region15: #{tpu_custom_call.1} parent=1 // pred_check_branch
      %37 = sbr.rel (0) target = $region17
    $region16: #{tpu_custom_call.1} parent=1 // pred_region
      _
    $region17: #{tpu_custom_call.1} parent=1 // pred_fallthru
      _
    // Predicated region
    $region18: #{tpu_custom_call.1} parent=1 // pred_check
      _
    $region19: #{tpu_custom_call.1} parent=1 // pred_check_branch
      %39 = sbr.rel (0) target = $region21
    $region20: #{tpu_custom_call.1} parent=1 // pred_region
      %40 = dma.done [#allocation3], 128
    $region21: #{tpu_custom_call.1} parent=1 // pred_fallthru
      _
    // Predicated region
    $region22: #{tpu_custom_call.1} parent=1 // pred_check
      _
    $region23: #{tpu_custom_call.1} parent=1 // pred_check_branch
      %42 = sbr.rel (0) target = $region25
    $region24: #{tpu_custom_call.1} parent=1 // pred_region
      %43 = dma.done [#allocation6], 2048
    $region25: #{tpu_custom_call.1} parent=1 // pred_fallthru
      _
    %p44 = scmp.eq.s32.totalorder 0, 0
    // Predicated region
    $region26: #{tpu_custom_call.1} parent=1 // pred_check
      %p45 = pneg %p44
    $region27: #{tpu_custom_call.1} parent=1 // pred_check_branch
      %47 = sbr.rel (%p45) target = $region29
    $region28: #{tpu_custom_call.1} parent=1 // pred_region
      %48 = vst [vmem:[#allocation7] sm:$0xff] 0.0
    $region29: #{tpu_custom_call.1} parent=1 // pred_fallthru
      _
    %v49 = vld [vmem:[#allocation7] sm:$0xff]
    %v50 = vld [vmem:[#allocation2] sm:$0xff]
    %v51 = vld [vmem:[#allocation5] sm:$0xff]
    %v52 = vld [vmem:[#allocation5 + $0x8] sm:$0xff]
    %v53 = vld [vmem:[#allocation5 + $0x10] sm:$0xff]
    %v54 = vld [vmem:[#allocation5 + $0x18] sm:$0xff]
    %v55 = vld [vmem:[#allocation5 + $0x20] sm:$0xff]
    %v56 = vld [vmem:[#allocation5 + $0x28] sm:$0xff]
    %v57 = vld [vmem:[#allocation5 + $0x30] sm:$0xff]
    %v58 = vld [vmem:[#allocation5 + $0x38] sm:$0xff]
    %v59 = vld [vmem:[#allocation5 + $0x40] sm:$0xff]
    %v60 = vld [vmem:[#allocation5 + $0x48] sm:$0xff]
    %v61 = vld [vmem:[#allocation5 + $0x50] sm:$0xff]
    %v62 = vld [vmem:[#allocation5 + $0x58] sm:$0xff]
    %v63 = vld [vmem:[#allocation5 + $0x60] sm:$0xff]
    %v64 = vld [vmem:[#allocation5 + $0x68] sm:$0xff]
    %v65 = vld [vmem:[#allocation5 + $0x70] sm:$0xff]
    %v66 = vld [vmem:[#allocation5 + $0x78] sm:$0xff]
    %67 = vmatprep.subr.mxu0 0.0
    %68 = vmatpush1.xpose.msra.mxu0 %v51
    %69 = vmatprep.subr.mxu0 0.0
    %70 = vmatpush1.xpose.msra.mxu0 %v52
    %71 = vmatprep.subr.mxu0 0.0
    %72 = vmatpush1.xpose.msra.mxu0 %v53
    %73 = vmatprep.subr.mxu0 0.0
    %74 = vmatpush1.xpose.msra.mxu0 %v54
    %75 = vmatprep.subr.mxu0 0.0
    %76 = vmatpush1.xpose.msra.mxu0 %v55
    %77 = vmatprep.subr.mxu0 0.0
    %78 = vmatpush1.xpose.msra.mxu0 %v56
    %79 = vmatprep.subr.mxu0 0.0
    %80 = vmatpush1.xpose.msra.mxu0 %v57
    %81 = vmatprep.subr.mxu0 0.0
    %82 = vmatpush1.xpose.msra.mxu0 %v58
    %83 = vmatprep.subr.mxu0 0.0
    %84 = vmatpush1.xpose.msra.mxu0 %v59
    %85 = vmatprep.subr.mxu0 0.0
    %86 = vmatpush1.xpose.msra.mxu0 %v60
    %87 = vmatprep.subr.mxu0 0.0
    %88 = vmatpush1.xpose.msra.mxu0 %v61
    %89 = vmatprep.subr.mxu0 0.0
    %90 = vmatpush1.xpose.msra.mxu0 %v62
    %91 = vmatprep.subr.mxu0 0.0
    %92 = vmatpush1.xpose.msra.mxu0 %v63
    %93 = vmatprep.subr.mxu0 0.0
    %94 = vmatpush1.xpose.msra.mxu0 %v64
    %95 = vmatprep.subr.mxu0 0.0
    %96 = vmatpush1.xpose.msra.mxu0 %v65
    %97 = vmatprep.subr.mxu0 0.0
    %98 = vmatpush1.xpose.msra.mxu0 %v66
    %99 = vmatprep.subr.mxu0 0.0
    %100 = vmatpush1.xpose.msra.mxu0 0.0
    %101 = vmatprep.subr.mxu0 0.0
    %102 = vmatpush1.xpose.msra.mxu0 0.0
    %103 = vmatprep.subr.mxu0 0.0
    %104 = vmatpush1.xpose.msra.mxu0 0.0
    %105 = vmatprep.subr.mxu0 0.0
    %106 = vmatpush1.xpose.msra.mxu0 0.0
    %107 = vmatprep.subr.mxu0 0.0
    %108 = vmatpush1.xpose.msra.mxu0 0.0
    %109 = vmatprep.subr.mxu0 0.0
    %110 = vmatpush1.xpose.msra.mxu0 0.0
    %111 = vmatprep.subr.mxu0 0.0
    %112 = vmatpush1.xpose.msra.mxu0 0.0
    %113 = vmatprep.subr.mxu0 0.0
    %114 = vmatpush1.xpose.msra.mxu0 0.0
    %115 = vmatprep.subr.mxu0 0.0
    %116 = vmatpush1.xpose.msra.mxu0 0.0
    %117 = vmatprep.subr.mxu0 0.0
    %118 = vmatpush1.xpose.msra.mxu0 0.0
    %119 = vmatprep.subr.mxu0 0.0
    %120 = vmatpush1.xpose.msra.mxu0 0.0
    %121 = vmatprep.subr.mxu0 0.0
    %122 = vmatpush1.xpose.msra.mxu0 0.0
    %123 = vmatprep.subr.mxu0 0.0
    %124 = vmatpush1.xpose.msra.mxu0 0.0
    %125 = vmatprep.subr.mxu0 0.0
    %126 = vmatpush1.xpose.msra.mxu0 0.0
    %127 = vmatprep.subr.mxu0 0.0
    %128 = vmatpush1.xpose.msra.mxu0 0.0
    %129 = vmatprep.subr.mxu0 0.0
    %130 = vmatpush1.xpose.msra.mxu0 0.0
    %131 = vmatprep.mubr.f32.mxu0 0.0
    %132 = vmatmul.mubr.f32.gmra.mrb[0].mxu0 %v50
    %v133 = vpop.f32.mrb[0].mxu0
    %v134 = vadd.f32 0.0, %v133
    %v135 = vpop.f32.mrb[0].mxu0
    %136 = vdwg.mxu0
    %v137 = vadd.f32 %v49, %v134
    %138 = vst [vmem:[#allocation7] sm:$0xff] %v137
    %p139 = scmp.eq.s32.totalorder 0, 0
    // Predicated region
    $region30: #{tpu_custom_call.1} parent=1 // pred_check
      %p140 = pneg %p139
    $region31: #{tpu_custom_call.1} parent=1 // pred_check_branch
      %142 = sbr.rel (%p140) target = $region33
    $region32: #{tpu_custom_call.1} parent=1 // pred_region
      %v143 = vld [vmem:[#allocation7] sm:$0xff]
      %v144 = vld [vmem:[#allocation2] sm:$0xff]
      %v145 = vld [vmem:[%s2] sm:$0x1]
      %v147 = vlaneseq
      %v148 = vshrl.u32 %v147, 7
      %v149 = vsub.s32 0, %v148
      %v150 = vrot.slane %v145, %v149
      %v152 = vmul.f32 %v144, %v150
      %v153 = vsub.f32 %v143, %v152
      %154 = vst [vmem:[#allocation7] sm:$0xff] %v153
    $region33: #{tpu_custom_call.1} parent=1 // pred_fallthru
      _
    // Predicated region
    $region34: #{tpu_custom_call.1} parent=1 // pred_check
      %p155 = pneg %p44
    $region35: #{tpu_custom_call.1} parent=1 // pred_check_branch
      %157 = sbr.rel (%p155) target = $region37
    $region36: #{tpu_custom_call.1} parent=1 // pred_region
      %v158 = vld [vmem:[#allocation7] sm:$0xff]
      %v159 = vld [vmem:[%s3] sm:$0x1]
      %v161 = vlaneseq
      %v162 = vshrl.u32 %v161, 7
      %v163 = vsub.s32 0, %v162
      %v164 = vrot.slane %v159, %v163
      %v166 = vadd.f32 %v158, %v164
      %167 = vst [vmem:[#allocation7] sm:$0xff] %v166
    $region37: #{tpu_custom_call.1} parent=1 // pred_fallthru
      _
    // Predicated region
    $region38: #{tpu_custom_call.1} parent=1 // pred_check
      _
    $region39: #{tpu_custom_call.1} parent=1 // pred_check_branch
      %169 = sbr.rel (0) target = $region41
    $region40: #{tpu_custom_call.1} parent=1 // pred_region
      %s171 = ssub.s32 128, 128
      %172 = vsyncadd [#allocation4], %s171
      %s174 = sshll.u32 [#allocation7], 4
      %s175 = int_to_ptr.vmem [resolvable:$true] %s174
      %177 = dma.vmem_to_hbm [thread:$0]  %s175, 128, %s4, [#allocation4]
    $region41: #{tpu_custom_call.1} parent=1 // pred_fallthru
      _
    // Predicated region
    $region42: #{tpu_custom_call.1} parent=1 // pred_check
      _
    $region43: #{tpu_custom_call.1} parent=1 // pred_check_branch
      %179 = sbr.rel (0) target = $region45
    $region44: #{tpu_custom_call.1} parent=1 // pred_region
      %180 = dma.done [#allocation4], 128
    $region45: #{tpu_custom_call.1} parent=1 // pred_fallthru
      _
    %181 = vsyncpa [#allocation3], 1
    %182 = vsyncpa [#allocation6], 1
    %183 = vsyncpa [#allocation4], 1

</llo_original>
